<compile_context>
chip_gen: v5e
topology: v5e:2x2
jax: 0.10.0
libtpu: 0.0.40
codegen_flags: <defaults>
</compile_context>

<pallas_src>
import functools

import jax
import jax.numpy as jnp
from jax import lax
from jax.experimental import pallas as pl
from jax.experimental.pallas import tpu as pltpu


def _round_up(x, m):
    return (x + m - 1) // m * m


def _cdiv(a, b):
    return (a + b - 1) // b


def _sublane_multiple(dtype):
    # dtype-native second-to-last-dim tile: 8 for f32, 16 for bf16, 32 for 8-bit.
    itemsize = max(1, jnp.dtype(dtype).itemsize)
    return max(8, 32 // itemsize)


def _vmem_budget_bytes():
    # Informational hardware query only (narrow fallback if the API differs);
    # real kernel errors are never swallowed here.
    cap = None
    try:
        info = pltpu.get_tpu_info()
        for name in ("vmem_capacity_bytes", "vmem_bytes"):
            v = getattr(info, name, None)
            if isinstance(v, int) and v > 0:
                cap = v
                break
    except Exception:
        cap = None
    if cap is None:
        cap = 64 << 20  # conservative: v7x per-TensorCore VMEM
    return int(0.75 * cap)


def _num_tensorcores():
    # v7x has 2 TensorCores per chip; prefer an even number of grid steps
    # there so the "parallel" axis splits evenly.  Default to 1 if unknown
    # (keeps v5e/v6e behaviour unchanged).
    probes = []
    try:
        probes.append(pltpu.get_tpu_info())
    except Exception:
        pass
    devs = jax.devices()
    if devs:
        probes.append(devs[0])
    for obj in probes:
        for name in ("num_cores", "num_tensorcores", "tensorcores_per_chip",
                     "cores_per_chip"):
            v = getattr(obj, name, None)
            if isinstance(v, int) and v >= 1:
                return v
    return 1


@functools.lru_cache(maxsize=None)
def _single_buffered_const_mode():
    """Explicit feature probe for BlockSpec(pipeline_mode=pl.Buffered(1)).

    Per perf review: the real pallas_call is built exactly one way; any error
    it raises propagates.  Only this trivial probe kernel is guarded.
    """
    if not hasattr(pl, "Buffered"):
        return None
    try:
        mode = pl.Buffered(1)
        const_spec = pl.BlockSpec((8, 128), lambda i: (0, 0), pipeline_mode=mode)
    except (TypeError, ValueError):
        return None

    def probe_kernel(x_ref, o_ref):
        o_ref[...] = x_ref[...]

    try:
        out = pl.pallas_call(
            probe_kernel,
            out_shape=jax.ShapeDtypeStruct((16, 128), jnp.float32),
            grid_spec=pltpu.PrefetchScalarGridSpec(
                num_scalar_prefetch=0,
                grid=(2,),
                in_specs=[const_spec],                       # constant, single-buffered
                out_specs=pl.BlockSpec((8, 128), lambda i: (i, 0)),
            ),
        )(jnp.zeros((8, 128), jnp.float32))
        jax.block_until_ready(out)
        return mode
    except Exception:
        return None


def _head_transform_kernel(x_ref, w_ref, c_ref, o_ref, *, eps, approximate_gelu):
    # x_ref: (TM, H) activations, native dtype (bf16 or f32)
    # w_ref: (H_in, H_out) pre-transposed nn.Linear weight (VMEM-resident)
    # c_ref: (3, H) f32 constants: row 0 = bias, row 1 = LN gamma, row 2 = LN beta
    h = jnp.dot(x_ref[...], w_ref[...], preferred_element_type=jnp.float32)
    consts = c_ref[...]
    h = h + consts[0:1, :]

    if approximate_gelu:
        # tanh approximation: cheaper on v6e/v7x (tanh runs on the EUP slot)
        # but deviates ~1e-3 from torch's default exact-erf GELU.
        inner = 0.7978845608028654 * (h + 0.044715 * (h * h * h))
        h = 0.5 * h * (1.0 + jnp.tanh(inner))
    else:
        # Exact (erf) GELU -- matches torch.nn.functional.gelu default.
        h = 0.5 * h * (1.0 + lax.erf(h * 0.7071067811865475))

    # LayerNorm over the hidden dim (biased variance, torch semantics), f32.
    # sum / sum-of-squares reduce concurrently right after the matmul; the
    # normalization is one fused scale-and-shift pass.
    inv_h = 1.0 / h.shape[-1]
    s1 = jnp.sum(h, axis=-1, keepdims=True)
    s2 = jnp.sum(h * h, axis=-1, keepdims=True)
    mean = s1 * inv_h
    var = jnp.maximum(s2 * inv_h - mean * mean, 0.0)
    rstd = lax.rsqrt(var + eps)
    y = (h - mean) * (rstd * consts[1:2, :]) + consts[2:3, :]

    o_ref[...] = y.astype(o_ref.dtype)


def chbert_prediction_head_transform(hidden_states, weight, bias, ln_gamma,
                                     ln_beta, *, eps=1e-12, tile_rows=1024,
                                     approximate_gelu=False):
    """hidden_states: [B, S, H]; weight: [H, H] in nn.Linear (out, in) layout.

    For best TPU throughput pass bf16 hidden_states/weight; GELU/LayerNorm
    math is always done in f32 inside the kernel.
    """
    B, S, H = hidden_states.shape
    rows = B * S
    out_dtype = hidden_states.dtype

    x2d = hidden_states.reshape(rows, H)            # view-like reshape, no pad
    w_t = jnp.transpose(weight)                     # one-time (in, out); kernel needs no rhs transpose
    consts = jnp.stack([bias.astype(jnp.float32),
                        ln_gamma.astype(jnp.float32),
                        ln_beta.astype(jnp.float32)], axis=0)  # (3, H)

    sub = _sublane_multiple(x2d.dtype)
    const_mode = _single_buffered_const_mode()
    const_kw = {} if const_mode is None else dict(pipeline_mode=const_mode)
    w_copies = 1 if const_mode is not None else 2   # VMEM accounting

    # ---- row tile choice -----------------------------------------------------
    tm = _round_up(max(sub, min(int(tile_rows), rows)), sub)
    if tm > rows:
        tm = rows                                   # single full-extent block (always layout-legal)

    budget = _vmem_budget_bytes()

    def vmem_needed(tm_):
        x_b = tm_ * H * x2d.dtype.itemsize
        o_b = tm_ * H * jnp.dtype(out_dtype).itemsize
        w_b = H * H * w_t.dtype.itemsize
        c_b = 8 * H * 4
        return 2 * x_b + 2 * o_b + w_copies * w_b + 2 * c_b + (4 << 20)

    # Shrink the row tile if (double-buffered x/out + resident weight) exceeds
    # the per-core VMEM budget.
    while tm > sub and tm % sub == 0 and vmem_needed(tm) > budget:
        tm = max(sub, _round_up(tm // 2, sub))
    # TODO(synk): when the resident (H,H) weight alone blows the VMEM budget
    # (H ~> 3.5k f32 on v7x's 64 MiB), add a K-tiling grid axis with an f32
    # VMEM accumulator + pl.when epilogue instead of relying on this shrink.

    # v7x: make the number of grid steps even so the single "parallel" axis
    # splits across both TensorCores.  No-op where one TensorCore is detected.
    if _num_tensorcores() >= 2:
        steps = _cdiv(rows, tm)
        if steps % 2 == 1:
            cand = _round_up(_cdiv(rows, steps + 1), sub)
            if sub <= cand <= rows and _cdiv(rows, cand) % 2 == 0:
                tm = cand

    grid = (_cdiv(rows, tm),)                       # partial last block is masked
    vmem_limit = int(min(max(vmem_needed(tm), 32 << 20), max(budget, 32 << 20)))

    in_specs = [
        pl.BlockSpec((tm, H), lambda i: (i, 0)),               # x row tile
        pl.BlockSpec((H, H), lambda i: (0, 0), **const_kw),    # resident W^T
        pl.BlockSpec((3, H), lambda i: (0, 0), **const_kw),    # bias / gamma / beta
    ]

    out = pl.pallas_call(
        functools.partial(_head_transform_kernel, eps=eps,
                          approximate_gelu=approximate_gelu),
        out_shape=jax.ShapeDtypeStruct((rows, H), out_dtype),
        grid_spec=pltpu.PrefetchScalarGridSpec(
            num_scalar_prefetch=0,
            grid=grid,
            in_specs=in_specs,
            out_specs=pl.BlockSpec((tm, H), lambda i: (i, 0)),
        ),
        compiler_params=pltpu.CompilerParams(
            dimension_semantics=("parallel",),
            vmem_limit_bytes=vmem_limit,
        ),
    )(x2d, w_t, consts)

    return out.reshape(B, S, H)


def _reference(hidden_states, weight, bias, ln_gamma, ln_beta, eps=1e-12):
    h = jnp.einsum("bsh,oh->bso", hidden_states, weight) + bias
    h = jax.nn.gelu(h, approximate=False)
    mean = jnp.mean(h, axis=-1, keepdims=True)
    var = jnp.mean((h - mean) ** 2, axis=-1, keepdims=True)
    return (h - mean) * lax.rsqrt(var + eps) * ln_gamma + ln_beta


if __name__ == "__main__":
    key = jax.random.PRNGKey(0)
    k_x, k_w, k_b, k_x2, k_w2, k_b2 = jax.random.split(key, 6)

    # ---- f32 path: tight tolerance vs f32 reference -------------------------
    B, S, H = 2, 8, 32
    x = jax.random.normal(k_x, (B, S, H), dtype=jnp.float32)
    weight = jax.random.normal(k_w, (H, H), dtype=jnp.float32) * 0.02
    bias = jax.random.normal(k_b, (H,), dtype=jnp.float32) * 0.02
    gamma = jnp.ones((H,), dtype=jnp.float32)
    beta = jnp.zeros((H,), dtype=jnp.float32)

    out = jax.block_until_ready(
        chbert_prediction_head_transform(x, weight, bias, gamma, beta))
    ref = _reference(x, weight, bias, gamma, beta)
    assert out.shape == (B, S, H)
    assert jnp.allclose(out, ref, atol=1e-4, rtol=1e-4), "f32 mismatch vs reference"

    # ---- bf16 activations/weight + ragged rows (partial last block path) ----
    B2, S2, H2 = 2, 5, 64          # rows=10 -> exercises the masked-tail path
    x2 = jax.random.normal(k_x2, (B2, S2, H2), dtype=jnp.float32)
    w2 = jax.random.normal(k_w2, (H2, H2), dtype=jnp.float32) * 0.02
    b2 = jax.random.normal(k_b2, (H2,), dtype=jnp.float32) * 0.02
    g2 = jnp.ones((H2,), dtype=jnp.float32)
    be2 = jnp.zeros((H2,), dtype=jnp.float32)

    out_bf = jax.block_until_ready(
        chbert_prediction_head_transform(
            x2.astype(jnp.bfloat16), w2.astype(jnp.bfloat16), b2, g2, be2))
    ref_bf = _reference(x2.astype(jnp.bfloat16).astype(jnp.float32),
                        w2.astype(jnp.bfloat16).astype(jnp.float32), b2, g2, be2)
    assert out_bf.shape == (B2, S2, H2)
    assert jnp.allclose(out_bf.astype(jnp.float32), ref_bf,
                        atol=5e-2, rtol=5e-2), "bf16 mismatch vs reference"

    print("KERNEL_OK")
</pallas_src>

<mosaic_0001>
module attributes {stable_mosaic.version = 11 : i64} {
  func.func @probe_kernel(%arg0: i32, %arg1: memref<8x128xf32, #tpu.memory_space<vmem>>, %arg2: memref<8x128xf32, #tpu.memory_space<vmem>>) attributes {dimension_semantics = [#tpu.dimension_semantics<arbitrary>], iteration_bounds = array<i64: 2>, scalar_prefetch = 0 : i64, scratch_operands = 0 : i64, tpu.core_type = #tpu.core_type<tc>, window_params = [{pipeline_mode = #tpu.pipeline_mode<synchronous>, transform_indices = @transform_0, window_bounds = array<i64: 8, 128>}, {transform_indices = @transform_1, window_bounds = array<i64: 8, 128>}]} {
    %c0 = arith.constant 0 : index
    %c0_0 = arith.constant 0 : index
    %0 = vector.load %arg1[%c0, %c0_0] : memref<8x128xf32, #tpu.memory_space<vmem>>, vector<8x128xf32>
    %c0_1 = arith.constant 0 : index
    %c0_2 = arith.constant 0 : index
    %1 = vector.load %arg2[%c0_1, %c0_2] : memref<8x128xf32, #tpu.memory_space<vmem>>, vector<8x128xf32>
    tpu.vector_store %arg2[%c0_1, %c0_2], %0 {strides = array<i32>} : memref<8x128xf32, #tpu.memory_space<vmem>>, vector<8x128xf32>,
    return
  }
  func.func @transform_0(%arg0: i32) -> (i32, i32) {
    %c0_i32 = arith.constant 0 : i32
    %c0_i32_0 = arith.constant 0 : i32
    %c0_i32_1 = arith.constant 0 : i32
    return %c0_i32, %c0_i32_0 : i32, i32
  }
  func.func @transform_1(%arg0: i32) -> (i32, i32) {
    %c0_i32 = arith.constant 0 : i32
    %c0_i32_0 = arith.constant 0 : i32
    return %arg0, %c0_i32 : i32, i32
  }
}

module attributes {stable_mosaic.version = 11 : i64} {
  func.func @_head_transform_kernel(%arg0: i32, %arg1: memref<16x32xf32, #tpu.memory_space<vmem>>, %arg2: memref<32x32xf32, #tpu.memory_space<vmem>>, %arg3: memref<3x32xf32, #tpu.memory_space<vmem>>, %arg4: memref<16x32xf32, #tpu.memory_space<vmem>>) attributes {dimension_semantics = [#tpu.dimension_semantics<parallel>], iteration_bounds = array<i64: 1>, scalar_prefetch = 0 : i64, scratch_operands = 0 : i64, tpu.core_type = #tpu.core_type<tc>, window_params = [{transform_indices = @transform_0, window_bounds = array<i64: 16, 32>}, {pipeline_mode = #tpu.pipeline_mode<synchronous>, transform_indices = @transform_1, window_bounds = array<i64: 32, 32>}, {pipeline_mode = #tpu.pipeline_mode<synchronous>, transform_indices = @transform_2, window_bounds = array<i64: 3, 32>}, {transform_indices = @transform_3, window_bounds = array<i64: 16, 32>}]} {
    %c0 = arith.constant 0 : index
    %c0_0 = arith.constant 0 : index
    %0 = vector.load %arg1[%c0, %c0_0] : memref<16x32xf32, #tpu.memory_space<vmem>>, vector<16x32xf32>
    %c0_1 = arith.constant 0 : index
    %c0_2 = arith.constant 0 : index
    %1 = vector.load %arg2[%c0_1, %c0_2] : memref<32x32xf32, #tpu.memory_space<vmem>>, vector<32x32xf32>
    %cst = arith.constant dense<0.000000e+00> : vector<16x32xf32>
    %2 = tpu.matmul %0, %1, %cst {dimension_numbers = #tpu.dot_dimension_numbers<[1], [0], [0], [1], [0, 0, 1, 1], [], []>} : vector<16x32xf32>, vector<32x32xf32>, vector<16x32xf32> -> vector<16x32xf32>
    %c0_3 = arith.constant 0 : index
    %c0_4 = arith.constant 0 : index
    %3 = vector.load %arg3[%c0_3, %c0_4] : memref<3x32xf32, #tpu.memory_space<vmem>>, vector<3x32xf32>
    %4 = vector.extract_strided_slice %3 {offsets = [0, 0], sizes = [1, 32], strides = [1, 1]} : vector<3x32xf32> to vector<1x32xf32>
    %5 = vector.broadcast %4 : vector<1x32xf32> to vector<16x32xf32>
    %6 = arith.addf %2, %5 : vector<16x32xf32>
    %cst_5 = arith.constant 5.000000e-01 : f32
    %7 = vector.broadcast %cst_5 : f32 to vector<16x32xf32>
    %8 = arith.mulf %7, %6 : vector<16x32xf32>
    %cst_6 = arith.constant 0.707106769 : f32
    %9 = vector.broadcast %cst_6 : f32 to vector<16x32xf32>
    %10 = arith.mulf %6, %9 : vector<16x32xf32>
    %11 = math.erf %10 : vector<16x32xf32>
    %cst_7 = arith.constant 1.000000e+00 : f32
    %12 = vector.broadcast %cst_7 : f32 to vector<16x32xf32>
    %13 = arith.addf %12, %11 : vector<16x32xf32>
    %14 = arith.mulf %8, %13 : vector<16x32xf32>
    %cst_8 = arith.constant dense<0.000000e+00> : vector<16xf32>
    %15 = vector.multi_reduction <add>, %14, %cst_8 [1] : vector<16x32xf32> to vector<16xf32>
    %16 = vector.shape_cast %15 : vector<16xf32> to vector<16x1xf32>
    %17 = arith.mulf %14, %14 : vector<16x32xf32>
    %cst_9 = arith.constant dense<0.000000e+00> : vector<16xf32>
    %18 = vector.multi_reduction <add>, %17, %cst_9 [1] : vector<16x32xf32> to vector<16xf32>
    %19 = vector.shape_cast %18 : vector<16xf32> to vector<16x1xf32>
    %cst_10 = arith.constant 3.125000e-02 : f32
    %20 = vector.broadcast %cst_10 : f32 to vector<16x1xf32>
    %21 = arith.mulf %16, %20 : vector<16x1xf32>
    %cst_11 = arith.constant 3.125000e-02 : f32
    %22 = vector.broadcast %cst_11 : f32 to vector<16x1xf32>
    %23 = arith.mulf %19, %22 : vector<16x1xf32>
    %24 = arith.mulf %21, %21 : vector<16x1xf32>
    %25 = arith.subf %23, %24 : vector<16x1xf32>
    %cst_12 = arith.constant 0.000000e+00 : f32
    %26 = vector.broadcast %cst_12 : f32 to vector<16x1xf32>
    %27 = arith.maximumf %25, %26 : vector<16x1xf32>
    %cst_13 = arith.constant 9.99999996E-13 : f32
    %28 = vector.broadcast %cst_13 : f32 to vector<16x1xf32>
    %29 = arith.addf %27, %28 : vector<16x1xf32>
    %30 = math.rsqrt %29 : vector<16x1xf32>
    %31 = vector.broadcast %21 : vector<16x1xf32> to vector<16x32xf32>
    %32 = arith.subf %14, %31 : vector<16x32xf32>
    %33 = vector.extract_strided_slice %3 {offsets = [1, 0], sizes = [1, 32], strides = [1, 1]} : vector<3x32xf32> to vector<1x32xf32>
    %34 = vector.broadcast %30 : vector<16x1xf32> to vector<16x32xf32>
    %35 = vector.broadcast %33 : vector<1x32xf32> to vector<16x32xf32>
    %36 = arith.mulf %34, %35 : vector<16x32xf32>
    %37 = arith.mulf %32, %36 : vector<16x32xf32>
    %38 = vector.extract_strided_slice %3 {offsets = [2, 0], sizes = [1, 32], strides = [1, 1]} : vector<3x32xf32> to vector<1x32xf32>
    %39 = vector.broadcast %38 : vector<1x32xf32> to vector<16x32xf32>
    %40 = arith.addf %37, %39 : vector<16x32xf32>
    %c0_14 = arith.constant 0 : index
    %c0_15 = arith.constant 0 : index
    %41 = vector.load %arg4[%c0_14, %c0_15] : memref<16x32xf32, #tpu.memory_space<vmem>>, vector<16x32xf32>
    tpu.vector_store %arg4[%c0_14, %c0_15], %40 {strides = array<i32>} : memref<16x32xf32, #tpu.memory_space<vmem>>, vector<16x32xf32>,
    return
  }
  func.func @transform_0(%arg0: i32) -> (i32, i32) {
    %c0_i32 = arith.constant 0 : i32
    %c0_i32_0 = arith.constant 0 : i32
    return %arg0, %c0_i32 : i32, i32
  }
  func.func @transform_1(%arg0: i32) -> (i32, i32) {
    %c0_i32 = arith.constant 0 : i32
    %c0_i32_0 = arith.constant 0 : i32
    %c0_i32_1 = arith.constant 0 : i32
    return %c0_i32, %c0_i32_0 : i32, i32
  }
  func.func @transform_2(%arg0: i32) -> (i32, i32) {
    %c0_i32 = arith.constant 0 : i32
    %c0_i32_0 = arith.constant 0 : i32
    %c0_i32_1 = arith.constant 0 : i32
    return %c0_i32, %c0_i32_0 : i32, i32
  }
  func.func @transform_3(%arg0: i32) -> (i32, i32) {
    %c0_i32 = arith.constant 0 : i32
    %c0_i32_0 = arith.constant 0 : i32
    return %arg0, %c0_i32 : i32, i32
  }
}

</mosaic_0001>

<llo_original>
// kernel: tpu_custom_call.1
$region0: #{tpu_custom_call.1}
  #allocation0 [shape = 'u32[]', space=smem, size = 0x4, offset = 0x4, fixed_abs, tag = 'smem constant byte address 0x4 - core index']
  #allocation1 [shape = 'u32[72,128]{1,0:T(1,128)}', space=vmem, size = 0x9000, scoped, tag = 'internal scratch']
  %s0 = inlined_call_operand.hbm [shape: f32[8,128], index: 0, kind: input, shape index: {}]
  %s1 = inlined_call_operand.hbm [shape: f32[16,128], index: 1, kind: output, shape index: {}]
  %s2 = sld [smem:[#allocation0]]
  $region41: #{tpu_custom_call.1} parent=0
    _
  %s4 = ssub.s32 1, %s2
  %s5 = scalar_select 0, %s4, %s2
  $region1: #{tpu_custom_call.1} parent=0
    #allocation2 [shape = 'u8[4096]{0}', space=vmem, size = 0x1000, scoped, tag = 'input window, operand 0, single buffered']
    #allocation3 [shape = 's32[2]{0}', space=sflag, size = 0x8, scoped, tag = 'scoped memory for tpu_custom_call.1']
    #allocation4 [shape = 's32[2]{0}', space=sflag, size = 0x8, scoped, tag = 'scoped memory for tpu_custom_call.1']
    #allocation5 [shape = 'u8[8192]{0}', space=vmem, size = 0x2000, scoped, tag = 'output window, operand 0']
    %6 = vsyncpa [#allocation3], 0
    %7 = vsyncpa [#allocation4], 0
    %s8 = scalar_lea.sflag [#allocation4], 1
    %9 = vsyncpa %s8, 0
    loop: start=0, step=1, limit=4
    $region2: #{tpu_custom_call.1} parent=1 // loop_pre_header
      _
    $region3: #{tpu_custom_call.1} parent=1 // loop_header
      %s11 = sphi 0, %s15
      %p12 = scmp.ge.s32.totalorder %s11, 4
      %s19 = sphi 0, %s19
      %s21 = sphi 0, %s19
      %s22 = sphi 0, %s21
      %s36 = sphi 0, %s22
      %s42 = sphi 0, %s44
      %s45 = sphi 0, %s42
      %s46 = sphi 0, %s45
      %s62 = sphi 0, %s46
    $region4: #{tpu_custom_call.1} parent=1 // loop_header_branch
      %14 = sbr.rel (%p12) target = $region8
    $region5: #{tpu_custom_call.1} parent=1 // loop_body
      %s16 = ssub.s32 %s11, 1
      %s17 = ssub.s32 %s11, 2
      %s18 = sadd.s32 %s11, 1
      %s20 = sadd.s32 %s19, 1
      %p23 = scmp.eq.s32.totalorder %s11, 1
      %p24 = scmp.ne.s32.totalorder %s19, %s21
      %p25 = scmp.eq.s32.totalorder %s11, 0
      %p26 = por %p24, %p25
      %p27 = scmp.ne.s32.totalorder %s19, %s21
      %p28 = scmp.eq.s32.totalorder %s16, 1
      %p29 = por %p27, %p28
      %p30 = scmp.ne.s32.totalorder %s21, %s22
      %p31 = scmp.eq.s32.totalorder %s16, 0
      %p32 = por %p30, %p31
      %p33 = scmp.ne.s32.totalorder %s21, %s22
      %p34 = scmp.eq.s32.totalorder %s17, 1
      %p35 = por %p33, %p34
      %p37 = scmp.ne.s32.totalorder %s22, %s36
      %p38 = scmp.eq.s32.totalorder %s17, 0
      %p39 = por %p37, %p38
      %s40 = ssub.s32 %s11, %s18
      %p41 = scmp.eq.s32.totalorder %s40, 0
      %s43 = sadd.s32 %s42, 1
      %s44 = scalar_select %p41, %s42, %s43
      %p47 = pneg %p41
      %p48 = scmp.eq.s32.totalorder %s11, 1
      %p49 = por %p47, %p48
      %p50 = scmp.ne.s32.totalorder %s42, %s45
      %p51 = scmp.eq.s32.totalorder %s11, 0
      %p52 = por %p50, %p51
      %p53 = scmp.ne.s32.totalorder %s42, %s45
      %p54 = scmp.eq.s32.totalorder %s16, 1
      %p55 = por %p53, %p54
      %p56 = scmp.ne.s32.totalorder %s45, %s46
      %p57 = scmp.eq.s32.totalorder %s16, 0
      %p58 = por %p56, %p57
      %p59 = scmp.ne.s32.totalorder %s45, %s46
      %p60 = scmp.eq.s32.totalorder %s17, 1
      %p61 = por %p59, %p60
      %p63 = scmp.ne.s32.totalorder %s46, %s62
      %p64 = scmp.eq.s32.totalorder %s17, 0
      %p65 = por %p63, %p64
      %p66 = scmp.le.s32.totalorder 1, %s11
      %p67 = scmp.lt.s32.totalorder %s11, 3
      %p68 = pnand %p66, %p67
      %p69 = pneg %p68
      // Predicated region
      $region9: #{tpu_custom_call.1} parent=5 // pred_check
        _
      $region10: #{tpu_custom_call.1} parent=5 // pred_check_branch
        %71 = sbr.rel (%p68) target = $region12
      $region11: #{tpu_custom_call.1} parent=5 // pred_region
        %s72 = ssub.s32 %s11, 1
        // Predicated region
        $region13: #{tpu_custom_call.1} parent=11 // pred_check
          %p73 = pneg %p32
        $region14: #{tpu_custom_call.1} parent=11 // pred_check_branch
          %75 = sbr.rel (%p73) target = $region16
        $region15: #{tpu_custom_call.1} parent=11 // pred_region
          %77 = vsyncadd [#allocation3], 0
          %s79 = sshll.u32 %s0, 4
          %s80 = int_to_ptr.hbm [resolvable:$true] %s79
          %s81 = sshll.u32 [#allocation2], 4
          %s82 = int_to_ptr.vmem [resolvable:$true] %s81
          %84 = dma.hbm_to_vmem [thread:$0]  %s80, 128, %s82, [#allocation3]
        $region16: #{tpu_custom_call.1} parent=11 // pred_fallthru
          _
      $region12: #{tpu_custom_call.1} parent=5 // pred_fallthru
        _
      %p85 = scmp.lt.s32.totalorder %s11, 2
      // Predicated region
      $region17: #{tpu_custom_call.1} parent=5 // pred_check
        %p86 = pneg %p85
      $region18: #{tpu_custom_call.1} parent=5 // pred_check_branch
        %88 = sbr.rel (%p86) target = $region20
      $region19: #{tpu_custom_call.1} parent=5 // pred_region
        _
      $region20: #{tpu_custom_call.1} parent=5 // pred_fallthru
        _
      %p89 = scmp.le.s32.totalorder 1, %s11
      %p90 = scmp.lt.s32.totalorder %s11, 3
      %p91 = pnand %p89, %p90
      %p92 = pneg %p91
      // Predicated region
      $region21: #{tpu_custom_call.1} parent=5 // pred_check
        _
      $region22: #{tpu_custom_call.1} parent=5 // pred_check_branch
        %94 = sbr.rel (%p91) target = $region24
      $region23: #{tpu_custom_call.1} parent=5 // pred_region
        %s95 = ssub.s32 %s11, 1
        // Predicated region
        $region25: #{tpu_custom_call.1} parent=23 // pred_check
          %p96 = pneg %p32
        $region26: #{tpu_custom_call.1} parent=23 // pred_check_branch
          %98 = sbr.rel (%p96) target = $region28
        $region27: #{tpu_custom_call.1} parent=23 // pred_region
          %100 = dma.done [#allocation3], 128
        $region28: #{tpu_custom_call.1} parent=23 // pred_fallthru
          _
        %p101 = pneg %p32
        %p102 = pneg %p29
        %p103 = pneg %p58
        %p104 = pneg %p55
        %s105 = sand.u32 %s45, 1
        %s106 = scalar_lea.sflag [#allocation4], %s105
        %s107 = sand.u32 %s45, 1
        %s108 = smul.addr %s107, 8
        %s109 = scalar_lea.vmem [#allocation5], %s108
        %v110 = vld [vmem:[#allocation2] sm:$0xff]
        %111 = vst [vmem:[%s109] sm:$0xff] %v110
        %s112 = sand.u32 %s45, 1
        %s113 = scalar_lea.sflag [#allocation4], %s112
        %s114 = sand.u32 %s45, 1
        %s115 = smul.addr %s114, 8
        %s116 = scalar_lea.vmem [#allocation5], %s115
        // Predicated region
        $region29: #{tpu_custom_call.1} parent=23 // pred_check
          %p117 = pneg %p55
        $region30: #{tpu_custom_call.1} parent=23 // pred_check_branch
          %119 = sbr.rel (%p117) target = $region32
        $region31: #{tpu_custom_call.1} parent=23 // pred_region
          %121 = vsyncadd %s113, 0
          %s122 = smul.addr %s16, 8
          %s123 = scalar_lea.hbm %s1, %s122
          %s125 = sshll.u32 %s116, 4
          %s126 = int_to_ptr.vmem [resolvable:$true] %s125
          %s127 = sshll.u32 %s123, 4
          %s128 = int_to_ptr.hbm [resolvable:$true] %s127
          %130 = dma.vmem_to_hbm [thread:$0]  %s126, 128, %s128, %s113
        $region32: #{tpu_custom_call.1} parent=23 // pred_fallthru
          _
      $region24: #{tpu_custom_call.1} parent=5 // pred_fallthru
        _
      %p131 = scmp.le.s32.totalorder 2, %s11
      // Predicated region
      $region33: #{tpu_custom_call.1} parent=5 // pred_check
        %p132 = pneg %p131
      $region34: #{tpu_custom_call.1} parent=5 // pred_check_branch
        %134 = sbr.rel (%p132) target = $region36
      $region35: #{tpu_custom_call.1} parent=5 // pred_region
        %s135 = ssub.s32 %s11, 2
        // Predicated region
        $region37: #{tpu_custom_call.1} parent=35 // pred_check
          %p136 = pneg %p61
        $region38: #{tpu_custom_call.1} parent=35 // pred_check_branch
          %138 = sbr.rel (%p136) target = $region40
        $region39: #{tpu_custom_call.1} parent=35 // pred_region
          %s139 = sand.u32 %s46, 1
          %s140 = scalar_lea.sflag [#allocation4], %s139
          %s141 = sand.u32 %s46, 1
          %s142 = smul.addr %s141, 8
          %s143 = scalar_lea.vmem [#allocation5], %s142
          %145 = dma.done %s140, 128
        $region40: #{tpu_custom_call.1} parent=35 // pred_fallthru
          _
      $region36: #{tpu_custom_call.1} parent=5 // pred_fallthru
        _
    $region6: #{tpu_custom_call.1} parent=1 // loop_footer
      %s15 = sadd.s32 1, %s11
    $region7: #{tpu_custom_call.1} parent=1 // loop_footer_branch
      %10 = sbr.rel target = $region3
    $region8: #{tpu_custom_call.1} parent=1 // loop_exit
      _
    %146 = vsyncpa [#allocation3], 1
    %s147 = scalar_lea.sflag [#allocation3], 1
    %148 = vsyncpa %s147, 1
    %149 = vsyncpa [#allocation4], 1
    %s150 = scalar_lea.sflag [#allocation4], 1
    %151 = vsyncpa %s150, 1

// kernel: tpu_custom_call.1
$region0: #{tpu_custom_call.1}
  #allocation0 [shape = 'u32[]', space=smem, size = 0x4, offset = 0x4, fixed_abs, tag = 'smem constant byte address 0x4 - core index']
  #allocation1 [shape = 'u32[72,128]{1,0:T(1,128)}', space=vmem, size = 0x9000, scoped, tag = 'internal scratch']
  %s0 = inlined_call_operand.hbm [shape: f32[16,32], index: 0, kind: input, shape index: {}]
  %s1 = inlined_call_operand.hbm [shape: f32[32,32], index: 1, kind: input, shape index: {}]
  %s2 = inlined_call_operand.hbm [shape: f32[3,32], index: 2, kind: input, shape index: {}]
  %s3 = inlined_call_operand.hbm [shape: f32[16,32], index: 3, kind: output, shape index: {}]
  %s4 = sld [smem:[#allocation0]]
  $region34: #{tpu_custom_call.1} parent=0
    _
  %s6 = ssub.s32 1, %s4
  %s7 = scalar_select 0, %s6, %s4
  $region1: #{tpu_custom_call.1} parent=0
    #allocation2 [shape = 'u8[8192]{0}', space=vmem, size = 0x2000, scoped, tag = 'input window, operand 0, single buffered']
    #allocation3 [shape = 's32[1]{0}', space=sflag, size = 0x4, scoped, tag = 'scoped memory for tpu_custom_call.1']
    #allocation4 [shape = 's32[1]{0}', space=sflag, size = 0x4, scoped, tag = 'scoped memory for tpu_custom_call.1']
    #allocation5 [shape = 'u8[16384]{0}', space=vmem, size = 0x4000, scoped, tag = 'input window, operand 1, single buffered']
    #allocation6 [shape = 's32[1]{0}', space=sflag, size = 0x4, scoped, tag = 'scoped memory for tpu_custom_call.1']
    #allocation7 [shape = 'u8[2048]{0}', space=vmem, size = 0x800, scoped, tag = 'input window, operand 2, single buffered']
    #allocation8 [shape = 'u8[8192]{0}', space=vmem, size = 0x2000, scoped, tag = 'output window, operand 0, single buffered']
    %8 = vsyncpa [#allocation3], 0
    %9 = vsyncpa [#allocation6], 0
    %10 = vsyncpa [#allocation4], 0
    // Predicated region
    $region2: #{tpu_custom_call.1} parent=1 // pred_check
      _
    $region3: #{tpu_custom_call.1} parent=1 // pred_check_branch
      %12 = sbr.rel (0) target = $region5
    $region4: #{tpu_custom_call.1} parent=1 // pred_region
      %14 = vsyncadd [#allocation3], 0
      %s15 = sshll.u32 %s0, 4
      %s16 = int_to_ptr.hbm [resolvable:$true] %s15
      %s17 = sshll.u32 [#allocation2], 4
      %s18 = int_to_ptr.vmem [resolvable:$true] %s17
      %23 = dma.hbm_to_vmem [thread:$0]  %s16, 256, %s18, [#allocation3], 128, 128, 8
    $region5: #{tpu_custom_call.1} parent=1 // pred_fallthru
      _
    // Predicated region
    $region6: #{tpu_custom_call.1} parent=1 // pred_check
      _
    $region7: #{tpu_custom_call.1} parent=1 // pred_check_branch
      %25 = sbr.rel (0) target = $region9
    $region8: #{tpu_custom_call.1} parent=1 // pred_region
      %27 = vsyncadd [#allocation6], 0
      %s28 = sshll.u32 %s1, 4
      %s29 = int_to_ptr.hbm [resolvable:$true] %s28
      %s30 = sshll.u32 [#allocation5], 4
      %s31 = int_to_ptr.vmem [resolvable:$true] %s30
      %36 = dma.hbm_to_vmem [thread:$0]  %s29, 512, %s31, [#allocation6], 128, 128, 8
    $region9: #{tpu_custom_call.1} parent=1 // pred_fallthru
      _
    // Predicated region
    $region10: #{tpu_custom_call.1} parent=1 // pred_check
      _
    $region11: #{tpu_custom_call.1} parent=1 // pred_check_branch
      %38 = sbr.rel (0) target = $region13
    $region12: #{tpu_custom_call.1} parent=1 // pred_region
      %40 = vsyncadd [#allocation6], 0
      %s42 = sshll.u32 %s2, 4
      %s43 = int_to_ptr.hbm [resolvable:$true] %s42
      %s44 = sshll.u32 [#allocation7], 4
      %s45 = int_to_ptr.vmem [resolvable:$true] %s44
      %47 = dma.hbm_to_vmem [thread:$0]  %s43, 64, %s45, [#allocation6]
    $region13: #{tpu_custom_call.1} parent=1 // pred_fallthru
      _
    // Predicated region
    $region14: #{tpu_custom_call.1} parent=1 // pred_check
      _
    $region15: #{tpu_custom_call.1} parent=1 // pred_check_branch
      %49 = sbr.rel (0) target = $region17
    $region16: #{tpu_custom_call.1} parent=1 // pred_region
      %51 = dma.done [#allocation3], 256
    $region17: #{tpu_custom_call.1} parent=1 // pred_fallthru
      _
    // Predicated region
    $region18: #{tpu_custom_call.1} parent=1 // pred_check
      _
    $region19: #{tpu_custom_call.1} parent=1 // pred_check_branch
      %53 = sbr.rel (0) target = $region21
    $region20: #{tpu_custom_call.1} parent=1 // pred_region
      %55 = dma.done [#allocation6], 512
    $region21: #{tpu_custom_call.1} parent=1 // pred_fallthru
      _
    // Predicated region
    $region22: #{tpu_custom_call.1} parent=1 // pred_check
      _
    $region23: #{tpu_custom_call.1} parent=1 // pred_check_branch
      %57 = sbr.rel (0) target = $region25
    $region24: #{tpu_custom_call.1} parent=1 // pred_region
      %59 = dma.done [#allocation6], 64
    $region25: #{tpu_custom_call.1} parent=1 // pred_fallthru
      _
    %v60 = vld [vmem:[#allocation2] sm:$0xff]
    %v61 = vld [vmem:[#allocation2 + $0x8] sm:$0xff]
    %v62 = vld [vmem:[#allocation5] sm:$0xff]
    %v63 = vld [vmem:[#allocation5 + $0x8] sm:$0xff]
    %v64 = vld [vmem:[#allocation5 + $0x10] sm:$0xff]
    %v65 = vld [vmem:[#allocation5 + $0x18] sm:$0xff]
    %v66 = vld [vmem:[#allocation7] sm:$0x7]
    %v67 = vperm.slane %v66, 0
    %vm68 = vcmask 261120
    %v70 = vsel %vm68, %v60, 0
    %v73 = vsel %vm68, %v61, 0
    %75 = vmatpush.msra.mxu0 0.0
    %76 = vmatpush.msra.mxu0 0.0
    %77 = vmatpush.msra.mxu0 0.0
    %78 = vmatpush.msra.mxu0 0.0
    %79 = vmatpush.msra.mxu0 0.0
    %80 = vmatpush.msra.mxu0 0.0
    %81 = vmatpush.msra.mxu0 0.0
    %82 = vmatpush.msra.mxu0 0.0
    %83 = vmatpush.msra.mxu0 0.0
    %84 = vmatpush.msra.mxu0 0.0
    %85 = vmatpush.msra.mxu0 0.0
    %86 = vmatpush.msra.mxu0 0.0
    %87 = vmatpush.msra.mxu0 %v65
    %88 = vmatpush.msra.mxu0 %v64
    %89 = vmatpush.msra.mxu0 %v63
    %90 = vmatpush.msra.mxu0 %v62
    %91 = vmatmul.f32.gmra.mxu0 %v70
    %v92 = vpop.f32.mrf.mxu0
    %v93 = vadd.f32 %v67, %v92
    %94 = vmatmul.f32.gmra.mxu0 %v73
    %v95 = vpop.f32.mrf.mxu0
    %v96 = vadd.f32 %v67, %v95
    %97 = vdwg.mxu0
    %v98 = vmul.f32 %v93, 0.5
    %v99 = vmul.f32 %v96, 0.5
    %v100 = vmul.f32 %v93, 0.70710677
    %v101 = vmul.f32 %v96, 0.70710677
    %v102 = vmul.f32 %v100, %v100
    %v103 = vmin.f32 16.0, %v102
    %v104 = vmul.f32 %v103, 2.1237322e-06
    %v105 = vadd.f32 %v104, 0.00028619796
    %v106 = vmul.f32 %v103, %v105
    %v107 = vadd.f32 %v106, 0.0036580483
    %v108 = vmul.f32 %v103, %v107
    %v109 = vadd.f32 %v108, 0.05243302
    %v110 = vmul.f32 %v103, %v109
    %v111 = vadd.f32 %v110, 0.18741608
    %v112 = vmul.f32 %v103, %v111
    %v113 = vadd.f32 %v112, 1.1283791
    %v114 = vmul.f32 %v100, %v113
    %v115 = vmul.f32 %v103, 3.8918573e-05
    %v116 = vadd.f32 %v115, 0.001143296
    %v117 = vmul.f32 %v103, %v116
    %v118 = vadd.f32 %v117, 0.014752088
    %v119 = vmul.f32 %v103, %v118
    %v120 = vadd.f32 %v119, 0.112945676
    %v121 = vmul.f32 %v103, %v120
    %v122 = vadd.f32 %v121, 0.4994258
    %v123 = vmul.f32 %v103, %v122
    %v124 = vadd.f32 %v123, 1.0
    %v125 = vrcp.pop %v124
    %v126 = vmul.f32 %v124, %v125
    %v127 = vsub.f32 1.0, %v126
    %v128 = vmul.f32 %v125, %v127
    %v129 = vadd.f32 %v125, %v128
    %vm130 = vweird.f32 %v124
    %vm131 = vweird.f32 %v125
    %vm132 = vmor %vm130, %vm131
    %v133 = vsel %vm132, %v125, %v129
    %v134 = vand.u32 2147483647, %v124
    %vm135 = vcmp.eq.f32.partialorder %v134, 8.507059e+37
    %v136 = vand.u32 %v124, 2147483648
    %v137 = vor.u32 1.1754944e-38, %v136
    %v138 = vsel %vm135, %v137, %v133
    %v139 = vmul.f32 %v114, %v138
    %v140 = vmin.f32 %v139, 1.0
    %v141 = vmax.f32 %v140, -1.0
    %v142 = vmul.f32 %v101, %v101
    %v143 = vmin.f32 16.0, %v142
    %v144 = vmul.f32 %v143, 2.1237322e-06
    %v145 = vadd.f32 %v144, 0.00028619796
    %v146 = vmul.f32 %v143, %v145
    %v147 = vadd.f32 %v146, 0.0036580483
    %v148 = vmul.f32 %v143, %v147
    %v149 = vadd.f32 %v148, 0.05243302
    %v150 = vmul.f32 %v143, %v149
    %v151 = vadd.f32 %v150, 0.18741608
    %v152 = vmul.f32 %v143, %v151
    %v153 = vadd.f32 %v152, 1.1283791
    %v154 = vmul.f32 %v101, %v153
    %v155 = vmul.f32 %v143, 3.8918573e-05
    %v156 = vadd.f32 %v155, 0.001143296
    %v157 = vmul.f32 %v143, %v156
    %v158 = vadd.f32 %v157, 0.014752088
    %v159 = vmul.f32 %v143, %v158
    %v160 = vadd.f32 %v159, 0.112945676
    %v161 = vmul.f32 %v143, %v160
    %v162 = vadd.f32 %v161, 0.4994258
    %v163 = vmul.f32 %v143, %v162
    %v164 = vadd.f32 %v163, 1.0
    %v165 = vrcp.pop %v164
    %v166 = vmul.f32 %v164, %v165
    %v167 = vsub.f32 1.0, %v166
    %v168 = vmul.f32 %v165, %v167
    %v169 = vadd.f32 %v165, %v168
    %vm170 = vweird.f32 %v164
    %vm171 = vweird.f32 %v165
    %vm172 = vmor %vm170, %vm171
    %v173 = vsel %vm172, %v165, %v169
    %v174 = vand.u32 2147483647, %v164
    %vm175 = vcmp.eq.f32.partialorder %v174, 8.507059e+37
    %v176 = vand.u32 %v164, 2147483648
    %v177 = vor.u32 1.1754944e-38, %v176
    %v178 = vsel %vm175, %v177, %v173
    %v179 = vmul.f32 %v154, %v178
    %v180 = vmin.f32 %v179, 1.0
    %v181 = vmax.f32 %v180, -1.0
    %v182 = vadd.f32 %v141, 1.0
    %v183 = vadd.f32 %v181, 1.0
    %v184 = vmul.f32 %v98, %v182
    %v185 = vmul.f32 %v99, %v183
    %v186 = vsel %vm68, %v184, 0.0
    %187 = vadd.xlane.f32.xlu0 %v186
    %v188 = vpop.xlane.xlu0 %187
    %v189 = vsel %vm68, %v185, 0.0
    %190 = vadd.xlane.f32.xlu0 %v189
    %v191 = vpop.xlane.xlu0 %190
    %v192 = vmul.f32 %v184, %v184
    %v193 = vmul.f32 %v185, %v185
    %v194 = vsel %vm68, %v192, 0.0
    %195 = vadd.xlane.f32.xlu0 %v194
    %v196 = vpop.xlane.xlu0 %195
    %v197 = vsel %vm68, %v193, 0.0
    %198 = vadd.xlane.f32.xlu0 %v197
    %v199 = vpop.xlane.xlu0 %198
    %v200 = vmul.f32 %v188, 0.03125
    %v201 = vmul.f32 %v191, 0.03125
    %v202 = vmul.f32 %v196, 0.03125
    %v203 = vmul.f32 %v199, 0.03125
    %v204 = vmul.f32 %v200, %v200
    %v205 = vmul.f32 %v201, %v201
    %v206 = vsub.f32 %v202, %v204
    %v207 = vsub.f32 %v203, %v205
    %v208 = vmax.f32 %v206, 0.0
    %v209 = vmax.f32 %v207, 0.0
    %v210 = vadd.f32 %v208, 1e-12
    %v211 = vadd.f32 %v209, 1e-12
    %v212 = vrsqrt.pop %v210
    %v213 = vmul.f32 %v212, %v210
    %v214 = vmul.f32 %v213, %v212
    %v215 = vmul.f32 0.5, %v214
    %v216 = vsub.f32 1.5, %v215
    %v217 = vmul.f32 %v212, %v216
    %vm218 = vweird.f32 %v210
    %vm219 = vweird.f32 %v212
    %vm220 = vmor %vm218, %vm219
    %v221 = vsel %vm220, %v212, %v217
    %v222 = vrsqrt.pop %v211
    %v223 = vmul.f32 %v222, %v211
    %v224 = vmul.f32 %v223, %v222
    %v225 = vmul.f32 0.5, %v224
    %v226 = vsub.f32 1.5, %v225
    %v227 = vmul.f32 %v222, %v226
    %vm228 = vweird.f32 %v211
    %vm229 = vweird.f32 %v222
    %vm230 = vmor %vm228, %vm229
    %v231 = vsel %vm230, %v222, %v227
    %v232 = vsub.f32 %v184, %v200
    %v233 = vsub.f32 %v185, %v201
    %v234 = vperm.slane %v66, 1
    %v235 = vmul.f32 %v221, %v234
    %v236 = vmul.f32 %v231, %v234
    %v237 = vmul.f32 %v232, %v235
    %v238 = vmul.f32 %v233, %v236
    %v239 = vperm.slane %v66, 2
    %v240 = vadd.f32 %v237, %v239
    %v241 = vadd.f32 %v238, %v239
    %242 = vst.msk [vmem:[#allocation8] sm:$0xff] %vm68, %v240
    %243 = vst.msk [vmem:[#allocation8 + $0x8] sm:$0xff] %vm68, %v241
    // Predicated region
    $region26: #{tpu_custom_call.1} parent=1 // pred_check
      _
    $region27: #{tpu_custom_call.1} parent=1 // pred_check_branch
      %245 = sbr.rel (0) target = $region29
    $region28: #{tpu_custom_call.1} parent=1 // pred_region
      %247 = vsyncadd [#allocation4], 0
      %s248 = sshll.u32 [#allocation8], 4
      %s249 = int_to_ptr.vmem [resolvable:$true] %s248
      %s250 = sshll.u32 %s3, 4
      %s251 = int_to_ptr.hbm [resolvable:$true] %s250
      %256 = dma.vmem_to_hbm [thread:$0]  %s249, 256, %s251, [#allocation4], 128, 128, 8
    $region29: #{tpu_custom_call.1} parent=1 // pred_fallthru
      _
    // Predicated region
    $region30: #{tpu_custom_call.1} parent=1 // pred_check
      _
    $region31: #{tpu_custom_call.1} parent=1 // pred_check_branch
      %258 = sbr.rel (0) target = $region33
    $region32: #{tpu_custom_call.1} parent=1 // pred_region
      %260 = dma.done [#allocation4], 256
    $region33: #{tpu_custom_call.1} parent=1 // pred_fallthru
      _
    %261 = vsyncpa [#allocation3], 1
    %262 = vsyncpa [#allocation6], 1
    %263 = vsyncpa [#allocation4], 1

</llo_original>
